<compile_context>
chip_gen: v5e
topology: v5e:2x2
jax: 0.10.0
libtpu: 0.0.40
codegen_flags: <defaults>
</compile_context>

<pallas_src>
import functools

import jax
import jax.numpy as jnp
from jax.experimental import pallas as pl
from jax.experimental.pallas import tpu as pltpu

LANE = 128       # pad feature dims (hidden/out) to multiples of the lane width
SUBLANE = 16     # bf16 sublane packing for the output tile rows


def _round_up(x, m):
    return ((x + m - 1) // m) * m


def mlp_kernel(x_ref, w1_ref, b1_ref, w2_ref, b2_ref, o_ref):
    # x_ref:  [TM, dim_in]   f32 (one batch tile; cast to bf16 in-register)
    # w1_ref: [dim_in, Hp]   bf16 (pre-transposed, zero-padded, VMEM-resident)
    # b1_ref: [1, Hp]        f32
    # w2_ref: [Hp, Op]       f32 (resident; second dot kept in f32)
    # b2_ref: [1, Op]        f32
    # o_ref:  [TM, Op]       bf16 (lane-dense: Op is a multiple of 128)
    x = x_ref[...].astype(jnp.bfloat16)                                 # halve x HBM traffic vs wrapper cast
    h = jnp.dot(x, w1_ref[...], preferred_element_type=jnp.float32)    # MXU, f32 acc
    h = jnp.maximum(h + b1_ref[...], 0.0)                              # bias + ReLU in f32 (VPU)
    # dropout (eval mode) == identity
    out = jnp.dot(h, w2_ref[...], preferred_element_type=jnp.float32)  # f32 x f32, keeps layer-1 accuracy
    o_ref[...] = (out + b2_ref[...]).astype(o_ref.dtype)               # bf16, unmasked 128-lane stores


def prepare_params(w1, b1, w2, b2):
    """One-time: transpose torch-layout weights, zero-pad to 128-lane multiples, cast."""
    dim_hidden, dim_in = w1.shape
    dim_out = w2.shape[0]
    hp = _round_up(dim_hidden, LANE)
    op = _round_up(dim_out, LANE)

    w1_t = jnp.zeros((dim_in, hp), jnp.bfloat16).at[:, :dim_hidden].set(
        w1.T.astype(jnp.bfloat16))
    # w2 stays f32: it is tiny (Hp x Op) and resident, and the second dot is done in f32.
    w2_t = jnp.zeros((hp, op), jnp.float32).at[:dim_hidden, :dim_out].set(
        w2.T.astype(jnp.float32))
    b1_p = jnp.zeros((1, hp), jnp.float32).at[:, :dim_hidden].set(b1.astype(jnp.float32))
    b2_p = jnp.zeros((1, op), jnp.float32).at[:, :dim_out].set(b2.astype(jnp.float32))
    return w1_t, b1_p, w2_t, b2_p


def _pick_batch_tile(b):
    """Batch tile: <=1024 rows, multiple of 16; >=2 grid steps when the batch allows."""
    if b >= 2 * SUBLANE:
        tm = _round_up(-(-b // 2), SUBLANE)   # ceil(b/2), 16-row packed
        return min(1024, tm)
    # Tiny batch: a single block equal to the full array (no divisibility constraint).
    return b


@functools.partial(jax.jit, static_argnames=("dim_out",))
def mlp_forward(x_nchw, w1_t, b1_p, w2_t, b2_p, *, dim_out):
    """x_nchw: [B, C, H, W] f32; params come from prepare_params (pre-transposed/padded)."""
    B = x_nchw.shape[0]
    dim_in = x_nchw.shape[1] * x_nchw.shape[2] * x_nchw.shape[3]
    hp = w1_t.shape[1]
    op = w2_t.shape[1]

    # torch's x.view(-1, C*H*W): reshape only (no cast, no pad -> no extra HBM pass).
    x_flat = x_nchw.reshape(B, dim_in)

    tm = _pick_batch_tile(B)
    grid = (pl.cdiv(B, tm),)

    flops = 2 * B * dim_in * hp + 2 * B * hp * op
    bytes_accessed = (B * dim_in * 4            # x read (f32)
                      + dim_in * hp * 2         # w1 (bf16)
                      + hp * op * 4             # w2 (f32)
                      + (hp + op) * 4           # biases
                      + B * op * 2)             # output write (bf16)

    # VMEM: double-buffered x/out tiles + resident weights, with 2x margin.
    vmem_need = (2 * tm * dim_in * 4 + 2 * tm * op * 2
                 + dim_in * hp * 2 + hp * op * 4 + (hp + op) * 4)
    vmem_limit = max(4 * 1024 * 1024, min(32 * 1024 * 1024, 2 * vmem_need))

    out = pl.pallas_call(
        mlp_kernel,
        out_shape=jax.ShapeDtypeStruct((B, op), jnp.bfloat16),
        grid_spec=pltpu.PrefetchScalarGridSpec(
            num_scalar_prefetch=0,
            grid=grid,
            in_specs=[
                pl.BlockSpec((tm, dim_in), lambda i: (i, 0)),   # activations: pipelined
                pl.BlockSpec((dim_in, hp), lambda i: (0, 0)),   # w1: VMEM-resident
                pl.BlockSpec((1, hp), lambda i: (0, 0)),
                pl.BlockSpec((hp, op), lambda i: (0, 0)),       # w2: VMEM-resident
                pl.BlockSpec((1, op), lambda i: (0, 0)),
            ],
            out_specs=pl.BlockSpec((tm, op), lambda i: (i, 0)),
        ),
        compiler_params=pltpu.CompilerParams(
            dimension_semantics=("parallel",),   # batch tiles shard across v7x's 2 TCs
            vmem_limit_bytes=int(vmem_limit),
        ),
        cost_estimate=pl.CostEstimate(
            flops=flops, transcendentals=0, bytes_accessed=bytes_accessed),
    )(x_flat, w1_t, b1_p, w2_t, b2_p)

    # Padded lanes (and any partial-block tail rows) are discarded here; cast the
    # tiny final slice back to f32 to match the module's output dtype.
    return out[:B, :dim_out].astype(jnp.float32)


def reference_forward(x_nchw, w1, b1, w2, b2):
    B = x_nchw.shape[0]
    x = x_nchw.reshape(B, -1)
    h = jnp.maximum(x @ w1.T + b1, 0.0)
    return h @ w2.T + b2


if __name__ == "__main__":
    # Small shapes consistent with the module's forward.
    B, C, H, W = 2, 4, 16, 16
    dim_in = C * H * W          # 1024
    dim_hidden = 32
    dim_out = 8

    key = jax.random.PRNGKey(0)
    kx, k1, k2, k3, k4 = jax.random.split(key, 5)

    x = jax.random.normal(kx, (B, C, H, W), dtype=jnp.float32)
    # Deterministic synthetic parameters (torch Linear weight layouts).
    w1 = jax.random.normal(k1, (dim_hidden, dim_in), dtype=jnp.float32) * 0.02
    b1 = jax.random.normal(k2, (dim_hidden,), dtype=jnp.float32) * 0.02
    w2 = jax.random.normal(k3, (dim_out, dim_hidden), dtype=jnp.float32) * 0.02
    b2 = jax.random.normal(k4, (dim_out,), dtype=jnp.float32) * 0.02

    params = prepare_params(w1, b1, w2, b2)   # one-time transpose/pad/cast
    out = mlp_forward(x, *params, dim_out=dim_out)
    out = jax.block_until_ready(out)

    ref = reference_forward(x, w1, b1, w2, b2)
    assert out.shape == (B, dim_out)
    # bf16 MXU inputs (x, w1) + bf16 output store -> relaxed tolerance vs f32 reference.
    assert jnp.allclose(out, ref, atol=2e-2, rtol=2e-2), float(jnp.max(jnp.abs(out - ref)))

    print("KERNEL_OK")
</pallas_src>

<mosaic_0001>
module attributes {stable_mosaic.version = 11 : i64} {
  func.func @mlp_kernel(%arg0: i32, %arg1: memref<2x1024xf32, #tpu.memory_space<vmem>>, %arg2: memref<1024x128xbf16, #tpu.memory_space<vmem>>, %arg3: memref<1x128xf32, #tpu.memory_space<vmem>>, %arg4: memref<128x128xf32, #tpu.memory_space<vmem>>, %arg5: memref<1x128xf32, #tpu.memory_space<vmem>>, %arg6: memref<2x128xbf16, #tpu.memory_space<vmem>>) attributes {dimension_semantics = [#tpu.dimension_semantics<parallel>], iteration_bounds = array<i64: 1>, scalar_prefetch = 0 : i64, scratch_operands = 0 : i64, tpu.core_type = #tpu.core_type<tc>, window_params = [{transform_indices = @transform_0, window_bounds = array<i64: 2, 1024>}, {pipeline_mode = #tpu.pipeline_mode<synchronous>, transform_indices = @transform_1, window_bounds = array<i64: 1024, 128>}, {pipeline_mode = #tpu.pipeline_mode<synchronous>, transform_indices = @transform_2, window_bounds = array<i64: 1, 128>}, {pipeline_mode = #tpu.pipeline_mode<synchronous>, transform_indices = @transform_3, window_bounds = array<i64: 128, 128>}, {pipeline_mode = #tpu.pipeline_mode<synchronous>, transform_indices = @transform_4, window_bounds = array<i64: 1, 128>}, {transform_indices = @transform_5, window_bounds = array<i64: 2, 128>}]} {
    %c0 = arith.constant 0 : index
    %c0_0 = arith.constant 0 : index
    %0 = vector.load %arg1[%c0, %c0_0] : memref<2x1024xf32, #tpu.memory_space<vmem>>, vector<2x1024xf32>
    %1 = arith.truncf %0 : vector<2x1024xf32> to vector<2x1024xbf16>
    %c0_1 = arith.constant 0 : index
    %c0_2 = arith.constant 0 : index
    %2 = vector.load %arg2[%c0_1, %c0_2] : memref<1024x128xbf16, #tpu.memory_space<vmem>>, vector<1024x128xbf16>
    %cst = arith.constant dense<0.000000e+00> : vector<2x128xf32>
    %3 = tpu.matmul %1, %2, %cst {dimension_numbers = #tpu.dot_dimension_numbers<[1], [0], [0], [1], [0, 0, 1, 1], [], []>} : vector<2x1024xbf16>, vector<1024x128xbf16>, vector<2x128xf32> -> vector<2x128xf32>
    %c0_3 = arith.constant 0 : index
    %c0_4 = arith.constant 0 : index
    %4 = vector.load %arg3[%c0_3, %c0_4] : memref<1x128xf32, #tpu.memory_space<vmem>>, vector<1x128xf32>
    %5 = vector.broadcast %4 : vector<1x128xf32> to vector<2x128xf32>
    %6 = arith.addf %3, %5 : vector<2x128xf32>
    %cst_5 = arith.constant 0.000000e+00 : f32
    %7 = vector.broadcast %cst_5 : f32 to vector<2x128xf32>
    %8 = arith.maximumf %6, %7 : vector<2x128xf32>
    %c0_6 = arith.constant 0 : index
    %c0_7 = arith.constant 0 : index
    %9 = vector.load %arg4[%c0_6, %c0_7] : memref<128x128xf32, #tpu.memory_space<vmem>>, vector<128x128xf32>
    %cst_8 = arith.constant dense<0.000000e+00> : vector<2x128xf32>
    %10 = tpu.matmul %8, %9, %cst_8 {dimension_numbers = #tpu.dot_dimension_numbers<[1], [0], [0], [1], [0, 0, 1, 1], [], []>} : vector<2x128xf32>, vector<128x128xf32>, vector<2x128xf32> -> vector<2x128xf32>
    %c0_9 = arith.constant 0 : index
    %c0_10 = arith.constant 0 : index
    %11 = vector.load %arg5[%c0_9, %c0_10] : memref<1x128xf32, #tpu.memory_space<vmem>>, vector<1x128xf32>
    %12 = vector.broadcast %11 : vector<1x128xf32> to vector<2x128xf32>
    %13 = arith.addf %10, %12 : vector<2x128xf32>
    %14 = arith.truncf %13 : vector<2x128xf32> to vector<2x128xbf16>
    %c0_11 = arith.constant 0 : index
    %c0_12 = arith.constant 0 : index
    %15 = vector.load %arg6[%c0_11, %c0_12] : memref<2x128xbf16, #tpu.memory_space<vmem>>, vector<2x128xbf16>
    tpu.vector_store %arg6[%c0_11, %c0_12], %14 {strides = array<i32>} : memref<2x128xbf16, #tpu.memory_space<vmem>>, vector<2x128xbf16>,
    return
  }
  func.func @transform_0(%arg0: i32) -> (i32, i32) {
    %c0_i32 = arith.constant 0 : i32
    %c0_i32_0 = arith.constant 0 : i32
    return %arg0, %c0_i32 : i32, i32
  }
  func.func @transform_1(%arg0: i32) -> (i32, i32) {
    %c0_i32 = arith.constant 0 : i32
    %c0_i32_0 = arith.constant 0 : i32
    %c0_i32_1 = arith.constant 0 : i32
    return %c0_i32, %c0_i32_0 : i32, i32
  }
  func.func @transform_2(%arg0: i32) -> (i32, i32) {
    %c0_i32 = arith.constant 0 : i32
    %c0_i32_0 = arith.constant 0 : i32
    %c0_i32_1 = arith.constant 0 : i32
    return %c0_i32, %c0_i32_0 : i32, i32
  }
  func.func @transform_3(%arg0: i32) -> (i32, i32) {
    %c0_i32 = arith.constant 0 : i32
    %c0_i32_0 = arith.constant 0 : i32
    %c0_i32_1 = arith.constant 0 : i32
    return %c0_i32, %c0_i32_0 : i32, i32
  }
  func.func @transform_4(%arg0: i32) -> (i32, i32) {
    %c0_i32 = arith.constant 0 : i32
    %c0_i32_0 = arith.constant 0 : i32
    %c0_i32_1 = arith.constant 0 : i32
    return %c0_i32, %c0_i32_0 : i32, i32
  }
  func.func @transform_5(%arg0: i32) -> (i32, i32) {
    %c0_i32 = arith.constant 0 : i32
    %c0_i32_0 = arith.constant 0 : i32
    return %arg0, %c0_i32 : i32, i32
  }
}

</mosaic_0001>

<llo_original>
// kernel: mlp_forward.1
$region0: #{mlp_forward.1}
  #allocation0 [shape = 'u32[]', space=smem, size = 0x4, offset = 0x4, fixed_abs, tag = 'smem constant byte address 0x4 - core index']
  #allocation1 [shape = 'u32[72,128]{1,0:T(1,128)}', space=vmem, size = 0x9000, scoped, tag = 'internal scratch']
  %s0 = inlined_call_operand.vmem [shape: f32[2,1024], index: 0, kind: input, shape index: {}]
  %s1 = inlined_call_operand.hbm [shape: bf16[1024,128], index: 1, kind: input, shape index: {}]
  %s2 = inlined_call_operand.vmem [shape: f32[1,128], index: 2, kind: input, shape index: {}]
  %s3 = inlined_call_operand.vmem [shape: f32[128,128], index: 3, kind: input, shape index: {}]
  %s4 = inlined_call_operand.vmem [shape: f32[1,128], index: 4, kind: input, shape index: {}]
  %s5 = inlined_call_operand.vmem [shape: bf16[2,128], index: 5, kind: output, shape index: {}]
  %s6 = sld [smem:[#allocation0]]
  $region34: #{mlp_forward.1} parent=0
    _
  %s8 = ssub.s32 1, %s6
  %s9 = scalar_select 0, %s8, %s6
  $region1: #{mlp_forward.1} parent=0
    #allocation2 [shape = 'u8[262144]{0}', space=vmem, size = 0x40000, scoped, tag = 'input window, operand 1, single buffered']
    #allocation3 [shape = 's32[1]{0}', space=sflag, size = 0x4, scoped, tag = 'scoped memory for mlp_forward.1']
    %10 = vsyncpa [#allocation3], 0
    // Predicated region
    $region2: #{mlp_forward.1} parent=1 // pred_check
      _
    $region3: #{mlp_forward.1} parent=1 // pred_check_branch
      %12 = sbr.rel (0) target = $region5
    $region4: #{mlp_forward.1} parent=1 // pred_region
      _
    $region5: #{mlp_forward.1} parent=1 // pred_fallthru
      _
    // Predicated region
    $region6: #{mlp_forward.1} parent=1 // pred_check
      _
    $region7: #{mlp_forward.1} parent=1 // pred_check_branch
      %14 = sbr.rel (0) target = $region9
    $region8: #{mlp_forward.1} parent=1 // pred_region
      %16 = vsyncadd [#allocation3], 0
      %s17 = sshll.u32 %s1, 4
      %s18 = int_to_ptr.hbm [resolvable:$true] %s17
      %s19 = sshll.u32 [#allocation2], 4
      %s20 = int_to_ptr.vmem [resolvable:$true] %s19
      %25 = dma.hbm_to_vmem [thread:$0]  %s18, 8192, %s20, [#allocation3], 64, 64, 4
    $region9: #{mlp_forward.1} parent=1 // pred_fallthru
      _
    // Predicated region
    $region10: #{mlp_forward.1} parent=1 // pred_check
      _
    $region11: #{mlp_forward.1} parent=1 // pred_check_branch
      %27 = sbr.rel (0) target = $region13
    $region12: #{mlp_forward.1} parent=1 // pred_region
      _
    $region13: #{mlp_forward.1} parent=1 // pred_fallthru
      _
    // Predicated region
    $region14: #{mlp_forward.1} parent=1 // pred_check
      _
    $region15: #{mlp_forward.1} parent=1 // pred_check_branch
      %29 = sbr.rel (0) target = $region17
    $region16: #{mlp_forward.1} parent=1 // pred_region
      _
    $region17: #{mlp_forward.1} parent=1 // pred_fallthru
      _
    // Predicated region
    $region18: #{mlp_forward.1} parent=1 // pred_check
      _
    $region19: #{mlp_forward.1} parent=1 // pred_check_branch
      %31 = sbr.rel (0) target = $region21
    $region20: #{mlp_forward.1} parent=1 // pred_region
      _
    $region21: #{mlp_forward.1} parent=1 // pred_fallthru
      _
    // Predicated region
    $region22: #{mlp_forward.1} parent=1 // pred_check
      _
    $region23: #{mlp_forward.1} parent=1 // pred_check_branch
      %33 = sbr.rel (0) target = $region25
    $region24: #{mlp_forward.1} parent=1 // pred_region
      %35 = dma.done [#allocation3], 8192
    $region25: #{mlp_forward.1} parent=1 // pred_fallthru
      _
    %v36 = vld [vmem:[%s0] sm:$0xff]
    %v37 = vld [vmem:[%s0 + $0x8] sm:$0xff]
    %40 = vst [vmem:[#allocation1] ss:$4 sm:$0xff] %v36
    %s41 = scalar_lea.vmem [#allocation1], 32
    %42 = vst [vmem:[%s41] ss:$4 sm:$0xff] %v37
    %v43 = vld.sshfl [vmem:[#allocation1] sm:$0xff pattern:$0x73625140]
    %v44 = vld.sshfl [vmem:[#allocation1 + $0x8] sm:$0xff pattern:$0x73625140]
    %v45 = vld.sshfl [vmem:[#allocation1 + $0x10] sm:$0xff pattern:$0x73625140]
    %v46 = vld.sshfl [vmem:[#allocation1 + $0x18] sm:$0xff pattern:$0x73625140]
    %v47 = vld.sshfl [vmem:[#allocation1 + $0x20] sm:$0xff pattern:$0x73625140]
    %v48 = vld.sshfl [vmem:[#allocation1 + $0x28] sm:$0xff pattern:$0x73625140]
    %v49 = vld.sshfl [vmem:[#allocation1 + $0x30] sm:$0xff pattern:$0x73625140]
    %v50 = vld.sshfl [vmem:[#allocation1 + $0x38] sm:$0xff pattern:$0x73625140]
    %v59 = vpack.c.bf16 %v43, %v43
    %v60 = vpack.c.bf16 %v44, %v44
    %v61 = vpack.c.bf16 %v45, %v45
    %v62 = vpack.c.bf16 %v46, %v46
    %v63 = vpack.c.bf16 %v47, %v47
    %v64 = vpack.c.bf16 %v48, %v48
    %v65 = vpack.c.bf16 %v49, %v49
    %v66 = vpack.c.bf16 %v50, %v50
    %v67 = vld [vmem:[#allocation2] sm:$0xf]
    %v68 = vld [vmem:[#allocation2 + $0x4] sm:$0xf]
    %v69 = vld [vmem:[#allocation2 + $0x8] sm:$0xf]
    %v70 = vld [vmem:[#allocation2 + $0xc] sm:$0xf]
    %v71 = vld [vmem:[#allocation2 + $0x10] sm:$0xf]
    %v72 = vld [vmem:[#allocation2 + $0x14] sm:$0xf]
    %v73 = vld [vmem:[#allocation2 + $0x18] sm:$0xf]
    %v74 = vld [vmem:[#allocation2 + $0x1c] sm:$0xf]
    %v75 = vld [vmem:[#allocation2 + $0x20] sm:$0xf]
    %v76 = vld [vmem:[#allocation2 + $0x24] sm:$0xf]
    %v77 = vld [vmem:[#allocation2 + $0x28] sm:$0xf]
    %v78 = vld [vmem:[#allocation2 + $0x2c] sm:$0xf]
    %v79 = vld [vmem:[#allocation2 + $0x30] sm:$0xf]
    %v80 = vld [vmem:[#allocation2 + $0x34] sm:$0xf]
    %v81 = vld [vmem:[#allocation2 + $0x38] sm:$0xf]
    %v82 = vld [vmem:[#allocation2 + $0x3c] sm:$0xf]
    %v83 = vld [vmem:[#allocation2 + $0x40] sm:$0xf]
    %v84 = vld [vmem:[#allocation2 + $0x44] sm:$0xf]
    %v85 = vld [vmem:[#allocation2 + $0x48] sm:$0xf]
    %v86 = vld [vmem:[#allocation2 + $0x4c] sm:$0xf]
    %v87 = vld [vmem:[#allocation2 + $0x50] sm:$0xf]
    %v88 = vld [vmem:[#allocation2 + $0x54] sm:$0xf]
    %v89 = vld [vmem:[#allocation2 + $0x58] sm:$0xf]
    %v90 = vld [vmem:[#allocation2 + $0x5c] sm:$0xf]
    %v91 = vld [vmem:[#allocation2 + $0x60] sm:$0xf]
    %v92 = vld [vmem:[#allocation2 + $0x64] sm:$0xf]
    %v93 = vld [vmem:[#allocation2 + $0x68] sm:$0xf]
    %v94 = vld [vmem:[#allocation2 + $0x6c] sm:$0xf]
    %v95 = vld [vmem:[#allocation2 + $0x70] sm:$0xf]
    %v96 = vld [vmem:[#allocation2 + $0x74] sm:$0xf]
    %v97 = vld [vmem:[#allocation2 + $0x78] sm:$0xf]
    %v98 = vld [vmem:[#allocation2 + $0x7c] sm:$0xf]
    %v99 = vld [vmem:[#allocation2 + $0x80] sm:$0xf]
    %v100 = vld [vmem:[#allocation2 + $0x84] sm:$0xf]
    %v101 = vld [vmem:[#allocation2 + $0x88] sm:$0xf]
    %v102 = vld [vmem:[#allocation2 + $0x8c] sm:$0xf]
    %v103 = vld [vmem:[#allocation2 + $0x90] sm:$0xf]
    %v104 = vld [vmem:[#allocation2 + $0x94] sm:$0xf]
    %v105 = vld [vmem:[#allocation2 + $0x98] sm:$0xf]
    %v106 = vld [vmem:[#allocation2 + $0x9c] sm:$0xf]
    %v107 = vld [vmem:[#allocation2 + $0xa0] sm:$0xf]
    %v108 = vld [vmem:[#allocation2 + $0xa4] sm:$0xf]
    %v109 = vld [vmem:[#allocation2 + $0xa8] sm:$0xf]
    %v110 = vld [vmem:[#allocation2 + $0xac] sm:$0xf]
    %v111 = vld [vmem:[#allocation2 + $0xb0] sm:$0xf]
    %v112 = vld [vmem:[#allocation2 + $0xb4] sm:$0xf]
    %v113 = vld [vmem:[#allocation2 + $0xb8] sm:$0xf]
    %v114 = vld [vmem:[#allocation2 + $0xbc] sm:$0xf]
    %v115 = vld [vmem:[#allocation2 + $0xc0] sm:$0xf]
    %v116 = vld [vmem:[#allocation2 + $0xc4] sm:$0xf]
    %v117 = vld [vmem:[#allocation2 + $0xc8] sm:$0xf]
    %v118 = vld [vmem:[#allocation2 + $0xcc] sm:$0xf]
    %v119 = vld [vmem:[#allocation2 + $0xd0] sm:$0xf]
    %v120 = vld [vmem:[#allocation2 + $0xd4] sm:$0xf]
    %v121 = vld [vmem:[#allocation2 + $0xd8] sm:$0xf]
    %v122 = vld [vmem:[#allocation2 + $0xdc] sm:$0xf]
    %v123 = vld [vmem:[#allocation2 + $0xe0] sm:$0xf]
    %v124 = vld [vmem:[#allocation2 + $0xe4] sm:$0xf]
    %v125 = vld [vmem:[#allocation2 + $0xe8] sm:$0xf]
    %v126 = vld [vmem:[#allocation2 + $0xec] sm:$0xf]
    %v127 = vld [vmem:[#allocation2 + $0xf0] sm:$0xf]
    %v128 = vld [vmem:[#allocation2 + $0xf4] sm:$0xf]
    %v129 = vld [vmem:[#allocation2 + $0xf8] sm:$0xf]
    %v130 = vld [vmem:[#allocation2 + $0xfc] sm:$0xf]
    %v131 = vld [vmem:[#allocation2 + $0x100] sm:$0xf]
    %v132 = vld [vmem:[#allocation2 + $0x104] sm:$0xf]
    %v133 = vld [vmem:[#allocation2 + $0x108] sm:$0xf]
    %v134 = vld [vmem:[#allocation2 + $0x10c] sm:$0xf]
    %v135 = vld [vmem:[#allocation2 + $0x110] sm:$0xf]
    %v136 = vld [vmem:[#allocation2 + $0x114] sm:$0xf]
    %v137 = vld [vmem:[#allocation2 + $0x118] sm:$0xf]
    %v138 = vld [vmem:[#allocation2 + $0x11c] sm:$0xf]
    %v139 = vld [vmem:[#allocation2 + $0x120] sm:$0xf]
    %v140 = vld [vmem:[#allocation2 + $0x124] sm:$0xf]
    %v141 = vld [vmem:[#allocation2 + $0x128] sm:$0xf]
    %v142 = vld [vmem:[#allocation2 + $0x12c] sm:$0xf]
    %v143 = vld [vmem:[#allocation2 + $0x130] sm:$0xf]
    %v144 = vld [vmem:[#allocation2 + $0x134] sm:$0xf]
    %v145 = vld [vmem:[#allocation2 + $0x138] sm:$0xf]
    %v146 = vld [vmem:[#allocation2 + $0x13c] sm:$0xf]
    %v147 = vld [vmem:[#allocation2 + $0x140] sm:$0xf]
    %v148 = vld [vmem:[#allocation2 + $0x144] sm:$0xf]
    %v149 = vld [vmem:[#allocation2 + $0x148] sm:$0xf]
    %v150 = vld [vmem:[#allocation2 + $0x14c] sm:$0xf]
    %v151 = vld [vmem:[#allocation2 + $0x150] sm:$0xf]
    %v152 = vld [vmem:[#allocation2 + $0x154] sm:$0xf]
    %v153 = vld [vmem:[#allocation2 + $0x158] sm:$0xf]
    %v154 = vld [vmem:[#allocation2 + $0x15c] sm:$0xf]
    %v155 = vld [vmem:[#allocation2 + $0x160] sm:$0xf]
    %v156 = vld [vmem:[#allocation2 + $0x164] sm:$0xf]
    %v157 = vld [vmem:[#allocation2 + $0x168] sm:$0xf]
    %v158 = vld [vmem:[#allocation2 + $0x16c] sm:$0xf]
    %v159 = vld [vmem:[#allocation2 + $0x170] sm:$0xf]
    %v160 = vld [vmem:[#allocation2 + $0x174] sm:$0xf]
    %v161 = vld [vmem:[#allocation2 + $0x178] sm:$0xf]
    %v162 = vld [vmem:[#allocation2 + $0x17c] sm:$0xf]
    %v163 = vld [vmem:[#allocation2 + $0x180] sm:$0xf]
    %v164 = vld [vmem:[#allocation2 + $0x184] sm:$0xf]
    %v165 = vld [vmem:[#allocation2 + $0x188] sm:$0xf]
    %v166 = vld [vmem:[#allocation2 + $0x18c] sm:$0xf]
    %v167 = vld [vmem:[#allocation2 + $0x190] sm:$0xf]
    %v168 = vld [vmem:[#allocation2 + $0x194] sm:$0xf]
    %v169 = vld [vmem:[#allocation2 + $0x198] sm:$0xf]
    %v170 = vld [vmem:[#allocation2 + $0x19c] sm:$0xf]
    %v171 = vld [vmem:[#allocation2 + $0x1a0] sm:$0xf]
    %v172 = vld [vmem:[#allocation2 + $0x1a4] sm:$0xf]
    %v173 = vld [vmem:[#allocation2 + $0x1a8] sm:$0xf]
    %v174 = vld [vmem:[#allocation2 + $0x1ac] sm:$0xf]
    %v175 = vld [vmem:[#allocation2 + $0x1b0] sm:$0xf]
    %v176 = vld [vmem:[#allocation2 + $0x1b4] sm:$0xf]
    %v177 = vld [vmem:[#allocation2 + $0x1b8] sm:$0xf]
    %v178 = vld [vmem:[#allocation2 + $0x1bc] sm:$0xf]
    %v179 = vld [vmem:[#allocation2 + $0x1c0] sm:$0xf]
    %v180 = vld [vmem:[#allocation2 + $0x1c4] sm:$0xf]
    %v181 = vld [vmem:[#allocation2 + $0x1c8] sm:$0xf]
    %v182 = vld [vmem:[#allocation2 + $0x1cc] sm:$0xf]
    %v183 = vld [vmem:[#allocation2 + $0x1d0] sm:$0xf]
    %v184 = vld [vmem:[#allocation2 + $0x1d4] sm:$0xf]
    %v185 = vld [vmem:[#allocation2 + $0x1d8] sm:$0xf]
    %v186 = vld [vmem:[#allocation2 + $0x1dc] sm:$0xf]
    %v187 = vld [vmem:[#allocation2 + $0x1e0] sm:$0xf]
    %v188 = vld [vmem:[#allocation2 + $0x1e4] sm:$0xf]
    %v189 = vld [vmem:[#allocation2 + $0x1e8] sm:$0xf]
    %v190 = vld [vmem:[#allocation2 + $0x1ec] sm:$0xf]
    %v191 = vld [vmem:[#allocation2 + $0x1f0] sm:$0xf]
    %v192 = vld [vmem:[#allocation2 + $0x1f4] sm:$0xf]
    %v193 = vld [vmem:[#allocation2 + $0x1f8] sm:$0xf]
    %v194 = vld [vmem:[#allocation2 + $0x1fc] sm:$0xf]
    %v195 = vld [vmem:[%s2] sm:$0x1]
    %v197 = vperm.slane %v195, 0
    %v327 = vunpack.c.l.b16 %v67
    %v328 = vunpack.c.l.b16 %v68
    %v329 = vunpack.c.l.b16 %v69
    %v330 = vunpack.c.l.b16 %v70
    %v331 = vunpack.c.l.b16 %v71
    %v332 = vunpack.c.l.b16 %v72
    %v333 = vunpack.c.l.b16 %v73
    %v334 = vunpack.c.l.b16 %v74
    %v335 = vunpack.c.l.b16 %v75
    %v336 = vunpack.c.l.b16 %v76
    %v337 = vunpack.c.l.b16 %v77
    %v338 = vunpack.c.l.b16 %v78
    %v339 = vunpack.c.l.b16 %v79
    %v340 = vunpack.c.l.b16 %v80
    %v341 = vunpack.c.l.b16 %v81
    %v342 = vunpack.c.l.b16 %v82
    %v343 = vunpack.c.l.b16 %v83
    %v344 = vunpack.c.l.b16 %v84
    %v345 = vunpack.c.l.b16 %v85
    %v346 = vunpack.c.l.b16 %v86
    %v347 = vunpack.c.l.b16 %v87
    %v348 = vunpack.c.l.b16 %v88
    %v349 = vunpack.c.l.b16 %v89
    %v350 = vunpack.c.l.b16 %v90
    %v351 = vunpack.c.l.b16 %v91
    %v352 = vunpack.c.l.b16 %v92
    %v353 = vunpack.c.l.b16 %v93
    %v354 = vunpack.c.l.b16 %v94
    %v355 = vunpack.c.l.b16 %v95
    %v356 = vunpack.c.l.b16 %v96
    %v357 = vunpack.c.l.b16 %v97
    %v358 = vunpack.c.l.b16 %v98
    %v359 = vunpack.c.l.b16 %v99
    %v360 = vunpack.c.l.b16 %v100
    %v361 = vunpack.c.l.b16 %v101
    %v362 = vunpack.c.l.b16 %v102
    %v363 = vunpack.c.l.b16 %v103
    %v364 = vunpack.c.l.b16 %v104
    %v365 = vunpack.c.l.b16 %v105
    %v366 = vunpack.c.l.b16 %v106
    %v367 = vunpack.c.l.b16 %v107
    %v368 = vunpack.c.l.b16 %v108
    %v369 = vunpack.c.l.b16 %v109
    %v370 = vunpack.c.l.b16 %v110
    %v371 = vunpack.c.l.b16 %v111
    %v372 = vunpack.c.l.b16 %v112
    %v373 = vunpack.c.l.b16 %v113
    %v374 = vunpack.c.l.b16 %v114
    %v375 = vunpack.c.l.b16 %v115
    %v376 = vunpack.c.l.b16 %v116
    %v377 = vunpack.c.l.b16 %v117
    %v378 = vunpack.c.l.b16 %v118
    %v379 = vunpack.c.l.b16 %v119
    %v380 = vunpack.c.l.b16 %v120
    %v381 = vunpack.c.l.b16 %v121
    %v382 = vunpack.c.l.b16 %v122
    %v383 = vunpack.c.l.b16 %v123
    %v384 = vunpack.c.l.b16 %v124
    %v385 = vunpack.c.l.b16 %v125
    %v386 = vunpack.c.l.b16 %v126
    %v387 = vunpack.c.l.b16 %v127
    %v388 = vunpack.c.l.b16 %v128
    %v389 = vunpack.c.l.b16 %v129
    %v390 = vunpack.c.l.b16 %v130
    %v391 = vunpack.c.l.b16 %v131
    %v392 = vunpack.c.l.b16 %v132
    %v393 = vunpack.c.l.b16 %v133
    %v394 = vunpack.c.l.b16 %v134
    %v395 = vunpack.c.l.b16 %v135
    %v396 = vunpack.c.l.b16 %v136
    %v397 = vunpack.c.l.b16 %v137
    %v398 = vunpack.c.l.b16 %v138
    %v399 = vunpack.c.l.b16 %v139
    %v400 = vunpack.c.l.b16 %v140
    %v401 = vunpack.c.l.b16 %v141
    %v402 = vunpack.c.l.b16 %v142
    %v403 = vunpack.c.l.b16 %v143
    %v404 = vunpack.c.l.b16 %v144
    %v405 = vunpack.c.l.b16 %v145
    %v406 = vunpack.c.l.b16 %v146
    %v407 = vunpack.c.l.b16 %v147
    %v408 = vunpack.c.l.b16 %v148
    %v409 = vunpack.c.l.b16 %v149
    %v410 = vunpack.c.l.b16 %v150
    %v411 = vunpack.c.l.b16 %v151
    %v412 = vunpack.c.l.b16 %v152
    %v413 = vunpack.c.l.b16 %v153
    %v414 = vunpack.c.l.b16 %v154
    %v415 = vunpack.c.l.b16 %v155
    %v416 = vunpack.c.l.b16 %v156
    %v417 = vunpack.c.l.b16 %v157
    %v418 = vunpack.c.l.b16 %v158
    %v419 = vunpack.c.l.b16 %v159
    %v420 = vunpack.c.l.b16 %v160
    %v421 = vunpack.c.l.b16 %v161
    %v422 = vunpack.c.l.b16 %v162
    %v423 = vunpack.c.l.b16 %v163
    %v424 = vunpack.c.l.b16 %v164
    %v425 = vunpack.c.l.b16 %v165
    %v426 = vunpack.c.l.b16 %v166
    %v427 = vunpack.c.l.b16 %v167
    %v428 = vunpack.c.l.b16 %v168
    %v429 = vunpack.c.l.b16 %v169
    %v430 = vunpack.c.l.b16 %v170
    %v431 = vunpack.c.l.b16 %v171
    %v432 = vunpack.c.l.b16 %v172
    %v433 = vunpack.c.l.b16 %v173
    %v434 = vunpack.c.l.b16 %v174
    %v435 = vunpack.c.l.b16 %v175
    %v436 = vunpack.c.l.b16 %v176
    %v437 = vunpack.c.l.b16 %v177
    %v438 = vunpack.c.l.b16 %v178
    %v439 = vunpack.c.l.b16 %v179
    %v440 = vunpack.c.l.b16 %v180
    %v441 = vunpack.c.l.b16 %v181
    %v442 = vunpack.c.l.b16 %v182
    %v443 = vunpack.c.l.b16 %v183
    %v444 = vunpack.c.l.b16 %v184
    %v445 = vunpack.c.l.b16 %v185
    %v446 = vunpack.c.l.b16 %v186
    %v447 = vunpack.c.l.b16 %v187
    %v448 = vunpack.c.l.b16 %v188
    %v449 = vunpack.c.l.b16 %v189
    %v450 = vunpack.c.l.b16 %v190
    %v451 = vunpack.c.l.b16 %v191
    %v452 = vunpack.c.l.b16 %v192
    %v453 = vunpack.c.l.b16 %v193
    %v454 = vunpack.c.l.b16 %v194
    %v455 = vpack.c.b16 %v328, %v327
    %v456 = vpack.c.b16 %v330, %v329
    %v457 = vpack.c.b16 %v332, %v331
    %v458 = vpack.c.b16 %v334, %v333
    %v459 = vpack.c.b16 %v336, %v335
    %v460 = vpack.c.b16 %v338, %v337
    %v461 = vpack.c.b16 %v340, %v339
    %v462 = vpack.c.b16 %v342, %v341
    %v463 = vpack.c.b16 %v344, %v343
    %v464 = vpack.c.b16 %v346, %v345
    %v465 = vpack.c.b16 %v348, %v347
    %v466 = vpack.c.b16 %v350, %v349
    %v467 = vpack.c.b16 %v352, %v351
    %v468 = vpack.c.b16 %v354, %v353
    %v469 = vpack.c.b16 %v356, %v355
    %v470 = vpack.c.b16 %v358, %v357
    %v471 = vpack.c.b16 %v360, %v359
    %v472 = vpack.c.b16 %v362, %v361
    %v473 = vpack.c.b16 %v364, %v363
    %v474 = vpack.c.b16 %v366, %v365
    %v475 = vpack.c.b16 %v368, %v367
    %v476 = vpack.c.b16 %v370, %v369
    %v477 = vpack.c.b16 %v372, %v371
    %v478 = vpack.c.b16 %v374, %v373
    %v479 = vpack.c.b16 %v376, %v375
    %v480 = vpack.c.b16 %v378, %v377
    %v481 = vpack.c.b16 %v380, %v379
    %v482 = vpack.c.b16 %v382, %v381
    %v483 = vpack.c.b16 %v384, %v383
    %v484 = vpack.c.b16 %v386, %v385
    %v485 = vpack.c.b16 %v388, %v387
    %v486 = vpack.c.b16 %v390, %v389
    %v487 = vpack.c.b16 %v392, %v391
    %v488 = vpack.c.b16 %v394, %v393
    %v489 = vpack.c.b16 %v396, %v395
    %v490 = vpack.c.b16 %v398, %v397
    %v491 = vpack.c.b16 %v400, %v399
    %v492 = vpack.c.b16 %v402, %v401
    %v493 = vpack.c.b16 %v404, %v403
    %v494 = vpack.c.b16 %v406, %v405
    %v495 = vpack.c.b16 %v408, %v407
    %v496 = vpack.c.b16 %v410, %v409
    %v497 = vpack.c.b16 %v412, %v411
    %v498 = vpack.c.b16 %v414, %v413
    %v499 = vpack.c.b16 %v416, %v415
    %v500 = vpack.c.b16 %v418, %v417
    %v501 = vpack.c.b16 %v420, %v419
    %v502 = vpack.c.b16 %v422, %v421
    %v503 = vpack.c.b16 %v424, %v423
    %v504 = vpack.c.b16 %v426, %v425
    %v505 = vpack.c.b16 %v428, %v427
    %v506 = vpack.c.b16 %v430, %v429
    %v507 = vpack.c.b16 %v432, %v431
    %v508 = vpack.c.b16 %v434, %v433
    %v509 = vpack.c.b16 %v436, %v435
    %v510 = vpack.c.b16 %v438, %v437
    %v511 = vpack.c.b16 %v440, %v439
    %v512 = vpack.c.b16 %v442, %v441
    %v513 = vpack.c.b16 %v444, %v443
    %v514 = vpack.c.b16 %v446, %v445
    %v515 = vpack.c.b16 %v448, %v447
    %v516 = vpack.c.b16 %v450, %v449
    %v517 = vpack.c.b16 %v452, %v451
    %v518 = vpack.c.b16 %v454, %v453
    %583 = vmatpush.bf16.msra.mxu0 %v462
    %584 = vmatpush.bf16.msra.mxu0 %v461
    %585 = vmatpush.bf16.msra.mxu0 %v460
    %586 = vmatpush.bf16.msra.mxu0 %v459
    %587 = vmatpush.bf16.msra.mxu0 %v458
    %588 = vmatpush.bf16.msra.mxu0 %v457
    %589 = vmatpush.bf16.msra.mxu0 %v456
    %590 = vmatpush.bf16.msra.mxu0 %v455
    %591 = vmatmul.bf16.gmra.mxu0 %v59
    %v592 = vpop.f32.mrf.mxu0
    %v593 = vadd.f32 %v197, %v592
    %v594 = vpop.f32.mrf.mxu0
    %595 = vdwg.mxu0
    %596 = vmatpush.bf16.msra.mxu0 %v470
    %597 = vmatpush.bf16.msra.mxu0 %v469
    %598 = vmatpush.bf16.msra.mxu0 %v468
    %599 = vmatpush.bf16.msra.mxu0 %v467
    %600 = vmatpush.bf16.msra.mxu0 %v466
    %601 = vmatpush.bf16.msra.mxu0 %v465
    %602 = vmatpush.bf16.msra.mxu0 %v464
    %603 = vmatpush.bf16.msra.mxu0 %v463
    %604 = vmatmul.bf16.gmra.mxu0 %v60
    %v605 = vpop.f32.mrf.mxu0
    %v606 = vadd.f32 %v593, %v605
    %v607 = vpop.f32.mrf.mxu0
    %608 = vdwg.mxu0
    %609 = vmatpush.bf16.msra.mxu0 %v478
    %610 = vmatpush.bf16.msra.mxu0 %v477
    %611 = vmatpush.bf16.msra.mxu0 %v476
    %612 = vmatpush.bf16.msra.mxu0 %v475
    %613 = vmatpush.bf16.msra.mxu0 %v474
    %614 = vmatpush.bf16.msra.mxu0 %v473
    %615 = vmatpush.bf16.msra.mxu0 %v472
    %616 = vmatpush.bf16.msra.mxu0 %v471
    %617 = vmatmul.bf16.gmra.mxu0 %v61
    %v618 = vpop.f32.mrf.mxu0
    %v619 = vadd.f32 %v606, %v618
    %v620 = vpop.f32.mrf.mxu0
    %621 = vdwg.mxu0
    %622 = vmatpush.bf16.msra.mxu0 %v486
    %623 = vmatpush.bf16.msra.mxu0 %v485
    %624 = vmatpush.bf16.msra.mxu0 %v484
    %625 = vmatpush.bf16.msra.mxu0 %v483
    %626 = vmatpush.bf16.msra.mxu0 %v482
    %627 = vmatpush.bf16.msra.mxu0 %v481
    %628 = vmatpush.bf16.msra.mxu0 %v480
    %629 = vmatpush.bf16.msra.mxu0 %v479
    %630 = vmatmul.bf16.gmra.mxu0 %v62
    %v631 = vpop.f32.mrf.mxu0
    %v632 = vadd.f32 %v619, %v631
    %v633 = vpop.f32.mrf.mxu0
    %634 = vdwg.mxu0
    %635 = vmatpush.bf16.msra.mxu0 %v494
    %636 = vmatpush.bf16.msra.mxu0 %v493
    %637 = vmatpush.bf16.msra.mxu0 %v492
    %638 = vmatpush.bf16.msra.mxu0 %v491
    %639 = vmatpush.bf16.msra.mxu0 %v490
    %640 = vmatpush.bf16.msra.mxu0 %v489
    %641 = vmatpush.bf16.msra.mxu0 %v488
    %642 = vmatpush.bf16.msra.mxu0 %v487
    %643 = vmatmul.bf16.gmra.mxu0 %v63
    %v644 = vpop.f32.mrf.mxu0
    %v645 = vadd.f32 %v632, %v644
    %v646 = vpop.f32.mrf.mxu0
    %647 = vdwg.mxu0
    %648 = vmatpush.bf16.msra.mxu0 %v502
    %649 = vmatpush.bf16.msra.mxu0 %v501
    %650 = vmatpush.bf16.msra.mxu0 %v500
    %651 = vmatpush.bf16.msra.mxu0 %v499
    %652 = vmatpush.bf16.msra.mxu0 %v498
    %653 = vmatpush.bf16.msra.mxu0 %v497
    %654 = vmatpush.bf16.msra.mxu0 %v496
    %655 = vmatpush.bf16.msra.mxu0 %v495
    %656 = vmatmul.bf16.gmra.mxu0 %v64
    %v657 = vpop.f32.mrf.mxu0
    %v658 = vadd.f32 %v645, %v657
    %v659 = vpop.f32.mrf.mxu0
    %660 = vdwg.mxu0
    %661 = vmatpush.bf16.msra.mxu0 %v510
    %662 = vmatpush.bf16.msra.mxu0 %v509
    %663 = vmatpush.bf16.msra.mxu0 %v508
    %664 = vmatpush.bf16.msra.mxu0 %v507
    %665 = vmatpush.bf16.msra.mxu0 %v506
    %666 = vmatpush.bf16.msra.mxu0 %v505
    %667 = vmatpush.bf16.msra.mxu0 %v504
    %668 = vmatpush.bf16.msra.mxu0 %v503
    %669 = vmatmul.bf16.gmra.mxu0 %v65
    %v670 = vpop.f32.mrf.mxu0
    %v671 = vadd.f32 %v658, %v670
    %v672 = vpop.f32.mrf.mxu0
    %673 = vdwg.mxu0
    %674 = vmatpush.bf16.msra.mxu0 %v518
    %675 = vmatpush.bf16.msra.mxu0 %v517
    %676 = vmatpush.bf16.msra.mxu0 %v516
    %677 = vmatpush.bf16.msra.mxu0 %v515
    %678 = vmatpush.bf16.msra.mxu0 %v514
    %679 = vmatpush.bf16.msra.mxu0 %v513
    %680 = vmatpush.bf16.msra.mxu0 %v512
    %681 = vmatpush.bf16.msra.mxu0 %v511
    %682 = vmatmul.bf16.gmra.mxu0 %v66
    %v683 = vpop.f32.mrf.mxu0
    %v684 = vadd.f32 %v671, %v683
    %v685 = vpop.f32.mrf.mxu0
    %686 = vdwg.mxu0
    %v687 = vmax.f32 %v684, 0.0
    %v688 = vld [vmem:[%s3] sm:$0xff]
    %v689 = vld [vmem:[%s3 + $0x8] sm:$0xff]
    %v690 = vld [vmem:[%s3 + $0x10] sm:$0xff]
    %v691 = vld [vmem:[%s3 + $0x18] sm:$0xff]
    %v692 = vld [vmem:[%s3 + $0x20] sm:$0xff]
    %v693 = vld [vmem:[%s3 + $0x28] sm:$0xff]
    %v694 = vld [vmem:[%s3 + $0x30] sm:$0xff]
    %v695 = vld [vmem:[%s3 + $0x38] sm:$0xff]
    %v696 = vld [vmem:[%s3 + $0x40] sm:$0xff]
    %v697 = vld [vmem:[%s3 + $0x48] sm:$0xff]
    %v698 = vld [vmem:[%s3 + $0x50] sm:$0xff]
    %v699 = vld [vmem:[%s3 + $0x58] sm:$0xff]
    %v700 = vld [vmem:[%s3 + $0x60] sm:$0xff]
    %v701 = vld [vmem:[%s3 + $0x68] sm:$0xff]
    %v702 = vld [vmem:[%s3 + $0x70] sm:$0xff]
    %v703 = vld [vmem:[%s3 + $0x78] sm:$0xff]
    %v704 = vld [vmem:[%s4] sm:$0x1]
    %v706 = vperm.slane %v704, 0
    %708 = vmatpush.msra.mxu0 %v703
    %709 = vmatpush.msra.mxu0 %v702
    %710 = vmatpush.msra.mxu0 %v701
    %711 = vmatpush.msra.mxu0 %v700
    %712 = vmatpush.msra.mxu0 %v699
    %713 = vmatpush.msra.mxu0 %v698
    %714 = vmatpush.msra.mxu0 %v697
    %715 = vmatpush.msra.mxu0 %v696
    %716 = vmatpush.msra.mxu0 %v695
    %717 = vmatpush.msra.mxu0 %v694
    %718 = vmatpush.msra.mxu0 %v693
    %719 = vmatpush.msra.mxu0 %v692
    %720 = vmatpush.msra.mxu0 %v691
    %721 = vmatpush.msra.mxu0 %v690
    %722 = vmatpush.msra.mxu0 %v689
    %723 = vmatpush.msra.mxu0 %v688
    %724 = vmatmul.f32.gmra.mxu0 %v687
    %v725 = vpop.f32.mrf.mxu0
    %v726 = vadd.f32 %v706, %v725
    %727 = vdwg.mxu0
    %v728 = vpack.c.bf16 %v726, %v726
    %729 = vst [vmem:[%s5] sm:$0x1] %v728
    // Predicated region
    $region26: #{mlp_forward.1} parent=1 // pred_check
      _
    $region27: #{mlp_forward.1} parent=1 // pred_check_branch
      %731 = sbr.rel (0) target = $region29
    $region28: #{mlp_forward.1} parent=1 // pred_region
      _
    $region29: #{mlp_forward.1} parent=1 // pred_fallthru
      _
    // Predicated region
    $region30: #{mlp_forward.1} parent=1 // pred_check
      _
    $region31: #{mlp_forward.1} parent=1 // pred_check_branch
      %733 = sbr.rel (0) target = $region33
    $region32: #{mlp_forward.1} parent=1 // pred_region
      _
    $region33: #{mlp_forward.1} parent=1 // pred_fallthru
      _
    %734 = vsyncpa [#allocation3], 1

</llo_original>
